<compile_context>
chip_gen: v7x
topology: tpu7x:2x2x1
jax: 0.10.0
libtpu: 0.0.40
codegen_flags: <defaults>
</compile_context>

<pallas_src>
import functools
import math

import jax
import jax.numpy as jnp
import numpy as np
from jax.experimental import pallas as pl
from jax.experimental.pallas import tpu as pltpu


def _round_up(a, b):
    return ((a + b - 1) // b) * b


def _sum_sq(x):
    # Two-stage keepdims reduction (lane reduce then sublane reduce) -> (1, 1).
    r = jnp.sum(x * x, axis=1, keepdims=True)
    return jnp.sum(r, axis=0, keepdims=True)


def _fused_kernel_hostnoise(x_ref, noise_ref, o_ref, acc_ref, *, inv_n):
    """grid = (2, T). pass 0: accumulate sum(x^2); pass 1: scale + add noise."""
    p = pl.program_id(0)
    i = pl.program_id(1)

    @pl.when(jnp.logical_and(p == 0, i == 0))
    def _init():
        acc_ref[...] = jnp.zeros_like(acc_ref)

    @pl.when(p == 0)
    def _reduce():
        xf = x_ref[...].astype(jnp.float32)
        acc_ref[...] += _sum_sq(xf)

    @pl.when(p == 1)
    def _apply():
        xf = x_ref[...].astype(jnp.float32)
        inv = jax.lax.rsqrt(acc_ref[...] * (2.0 * inv_n))   # (1,1), broadcasts
        o_ref[...] = (xf * inv + noise_ref[...]).astype(o_ref.dtype)


def _fused_kernel_tpuprng(x_ref, o_ref, acc_ref, *, inv_n, std, seed):
    """Same as above but draws N(0, std^2) noise with the on-chip PRNG."""
    p = pl.program_id(0)
    i = pl.program_id(1)

    @pl.when(jnp.logical_and(p == 0, i == 0))
    def _init():
        acc_ref[...] = jnp.zeros_like(acc_ref)

    @pl.when(p == 0)
    def _reduce():
        xf = x_ref[...].astype(jnp.float32)
        acc_ref[...] += _sum_sq(xf)

    @pl.when(p == 1)
    def _apply():
        pltpu.prng_seed(seed + i)                            # tile-unique seed
        xf = x_ref[...].astype(jnp.float32)
        inv = jax.lax.rsqrt(acc_ref[...] * (2.0 * inv_n))
        noise = pltpu.stateful_normal(xf.shape, jnp.float32) * std
        o_ref[...] = (xf * inv + noise).astype(o_ref.dtype)


def add_noise_forward(x, s, seed=0):
    """Pallas implementation of add_noise(s).forward(x)."""
    # TODO(synk): torch.normal uses torch's global stateful RNG; here noise is
    # drawn from an explicit seed (TPU hardware PRNG in-kernel, jax.random off-TPU).
    std = float(math.sqrt(s))
    orig_shape = x.shape
    orig_dtype = x.dtype
    n = int(np.prod(orig_shape))
    inv_n = 1.0 / n

    # ---- lane-dense slab layout (rows, W), W a multiple of 128 ----
    W = 128
    for cand in (2048, 1024, 512, 256, 128):
        if n % cand == 0 and (n // cand) % 8 == 0:
            W = cand
            break
    rows = pl.cdiv(n, W)

    # Row tile: ~512 KiB of f32 per block (always a multiple of 8 sublanes).
    target_rows = max(8, (512 * 1024) // (4 * W))
    block_rows = min(target_rows, _round_up(rows, 8))
    rows_padded = _round_up(rows, block_rows)
    n_tiles = rows_padded // block_rows
    total = rows_padded * W

    flat = jnp.ravel(x)
    if total != n:
        # Zero padding never perturbs sum(x^2); the exact 1/n is baked in.
        flat = jnp.pad(flat, (0, total - n))
    mat = flat.reshape(rows_padded, W)

    x_spec = pl.BlockSpec((block_rows, W), lambda p, i: (i, 0))
    # Output (and host-noise input) park on block 0 during pass 0 (no garbage
    # write-back, no wasted fetch); pass 1 walks the tiles.
    o_spec = pl.BlockSpec((block_rows, W), lambda p, i: (i * p, 0))

    on_tpu = jax.default_backend() == "tpu"
    if on_tpu:
        kernel = functools.partial(
            _fused_kernel_tpuprng, inv_n=inv_n, std=std, seed=int(seed))
        in_specs = [x_spec]
        operands = (mat,)
        compiler_params = pltpu.CompilerParams(
            dimension_semantics=("arbitrary", "arbitrary"),
            vmem_limit_bytes=32 * 1024 * 1024,
        )
    else:
        # Fallback path (e.g. CPU interpret mode): pltpu.prng_seed has no
        # lowering off-TPU, so stream precomputed Gaussian noise instead.
        noise = (jax.random.normal(jax.random.PRNGKey(seed),
                                   (rows_padded, W), dtype=jnp.float32) * std)
        kernel = functools.partial(_fused_kernel_hostnoise, inv_n=inv_n)
        in_specs = [x_spec, o_spec]   # noise follows the same walk as the output
        operands = (mat, noise)
        compiler_params = None

    out = pl.pallas_call(
        kernel,
        out_shape=jax.ShapeDtypeStruct((rows_padded, W), orig_dtype),
        grid=(2, n_tiles),
        in_specs=in_specs,
        out_specs=o_spec,
        scratch_shapes=[pltpu.VMEM((1, 1), jnp.float32)],
        compiler_params=compiler_params,
    )(*operands)

    if total == n:
        return out.reshape(orig_shape)
    return out.reshape(-1)[:n].reshape(orig_shape)


if __name__ == "__main__":
    key = jax.random.PRNGKey(0)
    # NCHW input, matching the PyTorch module's expected layout.
    x = jax.random.normal(key, (2, 4, 16, 16), dtype=jnp.float32)
    s = 0.1  # noise power; std = sqrt(s)

    y = add_noise_forward(x, s, seed=0)
    jax.block_until_ready(y)

    assert y.shape == x.shape and y.dtype == x.dtype
    assert bool(jnp.all(jnp.isfinite(y)))

    # Sanity: y - x/sqrt(mean(x^2)*2) must look like N(0, s) noise.
    x_norm = x / jnp.sqrt(jnp.mean(x * x) * 2.0)
    resid = (y - x_norm).ravel()
    resid_std = float(jnp.std(resid))
    resid_mean = float(jnp.mean(resid))
    assert 0.25 < resid_std < 0.40, resid_std      # sqrt(0.1) ~= 0.316
    assert abs(resid_mean) < 0.05, resid_mean

    print("KERNEL_OK")
</pallas_src>

<mosaic_0001>
module attributes {stable_mosaic.version = 11 : i64} {
  func.func @_fused_kernel_hostnoise(%arg0: i32, %arg1: i32, %arg2: memref<8x256xf32, #tpu.memory_space<vmem>>, %arg3: memref<8x256xf32, #tpu.memory_space<vmem>>, %arg4: memref<8x256xf32, #tpu.memory_space<vmem>>, %arg5: memref<1x1xf32, #tpu.memory_space<vmem>>) attributes {dimension_semantics = [#tpu.dimension_semantics<arbitrary>, #tpu.dimension_semantics<arbitrary>], iteration_bounds = array<i64: 2, 1>, scalar_prefetch = 0 : i64, scratch_operands = 1 : i64, tpu.core_type = #tpu.core_type<tc>, window_params = [{transform_indices = @transform_0, window_bounds = array<i64: 8, 256>}, {transform_indices = @transform_1, window_bounds = array<i64: 8, 256>}, {transform_indices = @transform_2, window_bounds = array<i64: 8, 256>}]} {
    %c0_i32 = arith.constant 0 : i32
    %0 = arith.cmpi eq, %arg0, %c0_i32 : i32
    %c0_i32_0 = arith.constant 0 : i32
    %1 = arith.cmpi eq, %arg1, %c0_i32_0 : i32
    %2 = arith.andi %0, %1 : i1
    %3 = arith.extui %2 : i1 to i32
    %c0_i32_1 = arith.constant 0 : i32
    %4 = arith.cmpi ne, %3, %c0_i32_1 : i32
    scf.if %4 {
      %cst = arith.constant 0.000000e+00 : f32
      %11 = vector.broadcast %cst : f32 to vector<1x1xf32>
      %c0 = arith.constant 0 : index
      %c0_5 = arith.constant 0 : index
      %12 = vector.load %arg5[%c0, %c0_5] : memref<1x1xf32, #tpu.memory_space<vmem>>, vector<1x1xf32>
      tpu.vector_store %arg5[%c0, %c0_5], %11 {strides = array<i32>} : memref<1x1xf32, #tpu.memory_space<vmem>>, vector<1x1xf32>,
    } else {
    }
    %c0_i32_2 = arith.constant 0 : i32
    %5 = arith.cmpi eq, %arg0, %c0_i32_2 : i32
    %6 = arith.extui %5 : i1 to i32
    %c0_i32_3 = arith.constant 0 : i32
    %7 = arith.cmpi ne, %6, %c0_i32_3 : i32
    scf.if %7 {
      %c0 = arith.constant 0 : index
      %c0_5 = arith.constant 0 : index
      %11 = vector.load %arg2[%c0, %c0_5] : memref<8x256xf32, #tpu.memory_space<vmem>>, vector<8x256xf32>
      %c0_6 = arith.constant 0 : index
      %c0_7 = arith.constant 0 : index
      %12 = vector.load %arg5[%c0_6, %c0_7] : memref<1x1xf32, #tpu.memory_space<vmem>>, vector<1x1xf32>
      %13 = arith.mulf %11, %11 : vector<8x256xf32>
      %cst = arith.constant dense<0.000000e+00> : vector<8xf32>
      %14 = vector.multi_reduction <add>, %13, %cst [1] : vector<8x256xf32> to vector<8xf32>
      %15 = vector.shape_cast %14 : vector<8xf32> to vector<8x1xf32>
      %cst_8 = arith.constant dense<0.000000e+00> : vector<1xf32>
      %16 = vector.multi_reduction <add>, %15, %cst_8 [0] : vector<8x1xf32> to vector<1xf32>
      %17 = vector.shape_cast %16 : vector<1xf32> to vector<1x1xf32>
      %18 = arith.addf %12, %17 : vector<1x1xf32>
      %c0_9 = arith.constant 0 : index
      %c0_10 = arith.constant 0 : index
      %19 = vector.load %arg5[%c0_9, %c0_10] : memref<1x1xf32, #tpu.memory_space<vmem>>, vector<1x1xf32>
      tpu.vector_store %arg5[%c0_9, %c0_10], %18 {strides = array<i32>} : memref<1x1xf32, #tpu.memory_space<vmem>>, vector<1x1xf32>,
    } else {
    }
    %c1_i32 = arith.constant 1 : i32
    %8 = arith.cmpi eq, %arg0, %c1_i32 : i32
    %9 = arith.extui %8 : i1 to i32
    %c0_i32_4 = arith.constant 0 : i32
    %10 = arith.cmpi ne, %9, %c0_i32_4 : i32
    scf.if %10 {
      %c0 = arith.constant 0 : index
      %c0_5 = arith.constant 0 : index
      %11 = vector.load %arg2[%c0, %c0_5] : memref<8x256xf32, #tpu.memory_space<vmem>>, vector<8x256xf32>
      %c0_6 = arith.constant 0 : index
      %c0_7 = arith.constant 0 : index
      %12 = vector.load %arg5[%c0_6, %c0_7] : memref<1x1xf32, #tpu.memory_space<vmem>>, vector<1x1xf32>
      %cst = arith.constant 9.765625E-4 : f32
      %13 = vector.broadcast %cst : f32 to vector<1x1xf32>
      %14 = arith.mulf %12, %13 : vector<1x1xf32>
      %15 = math.rsqrt %14 : vector<1x1xf32>
      %16 = vector.broadcast %15 : vector<1x1xf32> to vector<8x256xf32>
      %17 = arith.mulf %11, %16 : vector<8x256xf32>
      %c0_8 = arith.constant 0 : index
      %c0_9 = arith.constant 0 : index
      %18 = vector.load %arg3[%c0_8, %c0_9] : memref<8x256xf32, #tpu.memory_space<vmem>>, vector<8x256xf32>
      %19 = arith.addf %17, %18 : vector<8x256xf32>
      %c0_10 = arith.constant 0 : index
      %c0_11 = arith.constant 0 : index
      %20 = vector.load %arg4[%c0_10, %c0_11] : memref<8x256xf32, #tpu.memory_space<vmem>>, vector<8x256xf32>
      tpu.vector_store %arg4[%c0_10, %c0_11], %19 {strides = array<i32>} : memref<8x256xf32, #tpu.memory_space<vmem>>, vector<8x256xf32>,
    } else {
    }
    return
  }
  func.func @transform_0(%arg0: i32, %arg1: i32) -> (i32, i32) {
    %c0_i32 = arith.constant 0 : i32
    %c0_i32_0 = arith.constant 0 : i32
    return %arg1, %c0_i32 : i32, i32
  }
  func.func @transform_1(%arg0: i32, %arg1: i32) -> (i32, i32) {
    %0 = arith.muli %arg1, %arg0 : i32
    %c0_i32 = arith.constant 0 : i32
    %c0_i32_0 = arith.constant 0 : i32
    return %0, %c0_i32 : i32, i32
  }
  func.func @transform_2(%arg0: i32, %arg1: i32) -> (i32, i32) {
    %0 = arith.muli %arg1, %arg0 : i32
    %c0_i32 = arith.constant 0 : i32
    %c0_i32_0 = arith.constant 0 : i32
    return %0, %c0_i32 : i32, i32
  }
}

</mosaic_0001>

<llo_original>
// kernel: tpu_custom_call.1
$region0: #{tpu_custom_call.1}
  #allocation0 [shape = 'u32[]', space=smem, size = 0x4, offset = 0x4, fixed_abs, tag = 'smem constant byte address 0x4 - core index']
  #allocation1 [shape = 'u32[144,128]{1,0:T(1,128)}', space=vmem, size = 0x12000, scoped, tag = 'internal scratch']
  #allocation2 [shape = 'f32[1,1]{1,0:T(1,128)}', space=vmem, size = 0x200, scoped, tag = 'scratch operand']
  %s0 = inlined_call_operand.hbm [shape: f32[8,256], index: 0, kind: input, shape index: {}]
  %s1 = inlined_call_operand.hbm [shape: f32[8,256], index: 1, kind: input, shape index: {}]
  %s2 = inlined_call_operand.hbm [shape: f32[8,256], index: 2, kind: output, shape index: {}]
  %s3 = sld [smem:[#allocation0]]
  $region61: #{tpu_custom_call.1} parent=0
    _
  %s5 = ssub.s32 1, %s3
  %s6 = scalar_select 0, %s5, %s3
  $region1: #{tpu_custom_call.1} parent=0
    #allocation3 [shape = 'u8[8192]{0}', space=vmem, size = 0x2000, scoped, tag = 'input window, operand 0, single buffered']
    #allocation4 [shape = 's32[2]{0}', space=sflag, size = 0x8, scoped, tag = 'scoped memory for tpu_custom_call.1']
    #allocation5 [shape = 's32[2]{0}', space=sflag, size = 0x8, scoped, tag = 'scoped memory for tpu_custom_call.1']
    #allocation6 [shape = 'u8[16384]{0}', space=vmem, size = 0x4000, scoped, tag = 'input window, operand 1']
    #allocation7 [shape = 's32[2]{0}', space=sflag, size = 0x8, scoped, tag = 'scoped memory for tpu_custom_call.1']
    #allocation8 [shape = 'u8[16384]{0}', space=vmem, size = 0x4000, scoped, tag = 'output window, operand 0']
    %7 = vsyncpa [#allocation4], 0
    %8 = vsyncpa [#allocation7], 0
    %s9 = scalar_lea.sflag [#allocation7], 1
    %10 = vsyncpa %s9, 0
    %11 = vsyncpa [#allocation5], 0
    %s12 = scalar_lea.sflag [#allocation5], 1
    %13 = vsyncpa %s12, 0
    loop: start=0, step=1, limit=4
    $region2: #{tpu_custom_call.1} parent=1 // loop_pre_header
      _
    $region3: #{tpu_custom_call.1} parent=1 // loop_header
      %s15 = sphi 0, %s19
      %p16 = scmp.ge.s32.totalorder %s15, 4
      %s22 = sphi 0, %s34
      %s23 = sphi 0, %s30
      %s24 = sphi 0, %s22
      %s25 = sphi 0, %s23
      %s26 = sphi 0, %s24
      %s27 = sphi 0, %s25
      %s37 = sphi 0, %s39
      %s40 = sphi 0, %s37
      %s41 = sphi 0, %s40
      %s57 = sphi 0, %s41
      %s65 = sphi 0, %s67
      %s68 = sphi 0, %s65
      %s69 = sphi 0, %s68
      %s85 = sphi 0, %s69
      %s93 = sphi 0, %s95
      %s96 = sphi 0, %s93
      %s97 = sphi 0, %s96
      %s113 = sphi 0, %s97
    $region4: #{tpu_custom_call.1} parent=1 // loop_header_branch
      %18 = sbr.rel (%p16) target = $region8
    $region5: #{tpu_custom_call.1} parent=1 // loop_body
      %s20 = ssub.s32 %s15, 1
      %s21 = ssub.s32 %s15, 2
      %s28 = sadd.s32 1, %s23
      %p29 = scmp.ge.s32.totalorder %s28, 1
      %s30 = scalar_select %p29, 0, %s28
      %s31 = sadd.s32 1, %s22
      %s32 = scalar_select %p29, %s31, %s22
      %p33 = scmp.ge.s32.totalorder %s32, 2
      %s34 = scalar_select %p33, 0, %s32
      %s35 = ssub.s32 %s23, %s30
      %p36 = scmp.eq.s32.totalorder %s35, 0
      %s38 = sadd.s32 %s37, 1
      %s39 = scalar_select %p36, %s37, %s38
      %p42 = pneg %p36
      %p43 = scmp.eq.s32.totalorder %s15, 1
      %p44 = por %p42, %p43
      %p45 = scmp.ne.s32.totalorder %s37, %s40
      %p46 = scmp.eq.s32.totalorder %s15, 0
      %p47 = por %p45, %p46
      %p48 = scmp.ne.s32.totalorder %s37, %s40
      %p49 = scmp.eq.s32.totalorder %s20, 1
      %p50 = por %p48, %p49
      %p51 = scmp.ne.s32.totalorder %s40, %s41
      %p52 = scmp.eq.s32.totalorder %s20, 0
      %p53 = por %p51, %p52
      %p54 = scmp.ne.s32.totalorder %s40, %s41
      %p55 = scmp.eq.s32.totalorder %s21, 1
      %p56 = por %p54, %p55
      %p58 = scmp.ne.s32.totalorder %s41, %s57
      %p59 = scmp.eq.s32.totalorder %s21, 0
      %p60 = por %p58, %p59
      %s61 = smul.u32 %s23, %s22
      %s62 = smul.u32 %s30, %s34
      %s63 = ssub.s32 %s61, %s62
      %p64 = scmp.eq.s32.totalorder %s63, 0
      %s66 = sadd.s32 %s65, 1
      %s67 = scalar_select %p64, %s65, %s66
      %p70 = pneg %p64
      %p71 = scmp.eq.s32.totalorder %s15, 1
      %p72 = por %p70, %p71
      %p73 = scmp.ne.s32.totalorder %s65, %s68
      %p74 = scmp.eq.s32.totalorder %s15, 0
      %p75 = por %p73, %p74
      %p76 = scmp.ne.s32.totalorder %s65, %s68
      %p77 = scmp.eq.s32.totalorder %s20, 1
      %p78 = por %p76, %p77
      %p79 = scmp.ne.s32.totalorder %s68, %s69
      %p80 = scmp.eq.s32.totalorder %s20, 0
      %p81 = por %p79, %p80
      %p82 = scmp.ne.s32.totalorder %s68, %s69
      %p83 = scmp.eq.s32.totalorder %s21, 1
      %p84 = por %p82, %p83
      %p86 = scmp.ne.s32.totalorder %s69, %s85
      %p87 = scmp.eq.s32.totalorder %s21, 0
      %p88 = por %p86, %p87
      %s89 = smul.u32 %s23, %s22
      %s90 = smul.u32 %s30, %s34
      %s91 = ssub.s32 %s89, %s90
      %p92 = scmp.eq.s32.totalorder %s91, 0
      %s94 = sadd.s32 %s93, 1
      %s95 = scalar_select %p92, %s93, %s94
      %p98 = pneg %p92
      %p99 = scmp.eq.s32.totalorder %s15, 1
      %p100 = por %p98, %p99
      %p101 = scmp.ne.s32.totalorder %s93, %s96
      %p102 = scmp.eq.s32.totalorder %s15, 0
      %p103 = por %p101, %p102
      %p104 = scmp.ne.s32.totalorder %s93, %s96
      %p105 = scmp.eq.s32.totalorder %s20, 1
      %p106 = por %p104, %p105
      %p107 = scmp.ne.s32.totalorder %s96, %s97
      %p108 = scmp.eq.s32.totalorder %s20, 0
      %p109 = por %p107, %p108
      %p110 = scmp.ne.s32.totalorder %s96, %s97
      %p111 = scmp.eq.s32.totalorder %s21, 1
      %p112 = por %p110, %p111
      %p114 = scmp.ne.s32.totalorder %s97, %s113
      %p115 = scmp.eq.s32.totalorder %s21, 0
      %p116 = por %p114, %p115
      %p117 = scmp.le.s32.totalorder 1, %s15
      %p118 = scmp.lt.s32.totalorder %s15, 3
      %p119 = pnand %p117, %p118
      %p120 = pneg %p119
      // Predicated region
      $region9: #{tpu_custom_call.1} parent=5 // pred_check
        _
      $region10: #{tpu_custom_call.1} parent=5 // pred_check_branch
        %122 = sbr.rel (%p119) target = $region12
      $region11: #{tpu_custom_call.1} parent=5 // pred_region
        %s123 = ssub.s32 %s15, 1
        // Predicated region
        $region13: #{tpu_custom_call.1} parent=11 // pred_check
          %p124 = pneg %p53
        $region14: #{tpu_custom_call.1} parent=11 // pred_check_branch
          %126 = sbr.rel (%p124) target = $region16
        $region15: #{tpu_custom_call.1} parent=11 // pred_region
          %s128 = ssub.s32 256, 256
          %129 = vsyncadd [#allocation4], %s128
          %s130 = smul.addr %s25, 2
          %s131 = smul.addr %s130, 128
          %s132 = scalar_lea.hbm %s0, %s131
          %s134 = sshll.u32 [#allocation3], 4
          %s135 = int_to_ptr.vmem [resolvable:$true] %s134
          %137 = dma.hbm_to_vmem [thread:$0]  %s132, 256, %s135, [#allocation4]
        $region16: #{tpu_custom_call.1} parent=11 // pred_fallthru
          _
      $region12: #{tpu_custom_call.1} parent=5 // pred_fallthru
        _
      %p138 = scmp.lt.s32.totalorder %s15, 2
      // Predicated region
      $region17: #{tpu_custom_call.1} parent=5 // pred_check
        %p139 = pneg %p138
      $region18: #{tpu_custom_call.1} parent=5 // pred_check_branch
        %141 = sbr.rel (%p139) target = $region20
      $region19: #{tpu_custom_call.1} parent=5 // pred_region
        // Predicated region
        $region21: #{tpu_custom_call.1} parent=19 // pred_check
          %p142 = pneg %p75
        $region22: #{tpu_custom_call.1} parent=19 // pred_check_branch
          %144 = sbr.rel (%p142) target = $region24
        $region23: #{tpu_custom_call.1} parent=19 // pred_region
          %s145 = sand.u32 %s65, 1
          %s146 = scalar_lea.sflag [#allocation7], %s145
          %s147 = sand.u32 %s65, 1
          %s148 = smul.addr %s147, 16
          %s149 = scalar_lea.vmem [#allocation6], %s148
          %s150 = smul.u32 %s23, %s22
          %s152 = ssub.s32 256, 256
          %153 = vsyncadd %s146, %s152
          %s154 = smul.addr %s150, 2
          %s155 = smul.addr %s154, 128
          %s156 = scalar_lea.hbm %s1, %s155
          %s158 = sshll.u32 %s149, 4
          %s159 = int_to_ptr.vmem [resolvable:$true] %s158
          %161 = dma.hbm_to_vmem [thread:$0]  %s156, 256, %s159, %s146
        $region24: #{tpu_custom_call.1} parent=19 // pred_fallthru
          _
      $region20: #{tpu_custom_call.1} parent=5 // pred_fallthru
        _
      %p162 = scmp.le.s32.totalorder 1, %s15
      %p163 = scmp.lt.s32.totalorder %s15, 3
      %p164 = pnand %p162, %p163
      %p165 = pneg %p164
      // Predicated region
      $region25: #{tpu_custom_call.1} parent=5 // pred_check
        _
      $region26: #{tpu_custom_call.1} parent=5 // pred_check_branch
        %167 = sbr.rel (%p164) target = $region28
      $region27: #{tpu_custom_call.1} parent=5 // pred_region
        %s168 = ssub.s32 %s15, 1
        // Predicated region
        $region29: #{tpu_custom_call.1} parent=27 // pred_check
          %p169 = pneg %p53
        $region30: #{tpu_custom_call.1} parent=27 // pred_check_branch
          %171 = sbr.rel (%p169) target = $region32
        $region31: #{tpu_custom_call.1} parent=27 // pred_region
          %172 = dma.done [#allocation4], 256
        $region32: #{tpu_custom_call.1} parent=27 // pred_fallthru
          _
        %s173 = sand.u32 %s68, 1
        %s174 = scalar_lea.sflag [#allocation7], %s173
        %s175 = sand.u32 %s68, 1
        %s176 = smul.addr %s175, 16
        %s177 = scalar_lea.vmem [#allocation6], %s176
        // Predicated region
        $region33: #{tpu_custom_call.1} parent=27 // pred_check
          %p178 = pneg %p81
        $region34: #{tpu_custom_call.1} parent=27 // pred_check_branch
          %180 = sbr.rel (%p178) target = $region36
        $region35: #{tpu_custom_call.1} parent=27 // pred_region
          %181 = dma.done %s174, 256
        $region36: #{tpu_custom_call.1} parent=27 // pred_fallthru
          _
        %p182 = pneg %p53
        %p183 = pneg %p50
        %s184 = sand.u32 %s68, 1
        %s185 = scalar_lea.sflag [#allocation7], %s184
        %s186 = sand.u32 %s68, 1
        %s187 = smul.addr %s186, 16
        %s188 = scalar_lea.vmem [#allocation6], %s187
        %p189 = pneg %p81
        %p190 = pneg %p78
        %p191 = pneg %p109
        %p192 = pneg %p106
        %s193 = sand.u32 %s96, 1
        %s194 = scalar_lea.sflag [#allocation5], %s193
        %s195 = sand.u32 %s96, 1
        %s196 = smul.addr %s195, 16
        %s197 = scalar_lea.vmem [#allocation8], %s196
        %s198 = smul.u32 %s25, %s24
        %s199 = smul.u32 %s25, %s24
        %p200 = scmp.eq.s32.totalorder %s24, 0
        %p201 = scmp.eq.s32.totalorder %s25, 0
        %p202 = pnand %p200, %p201
        %p203 = pneg %p202
        // Predicated region
        $region37: #{tpu_custom_call.1} parent=27 // pred_check
          _
        $region38: #{tpu_custom_call.1} parent=27 // pred_check_branch
          %205 = sbr.rel (%p202) target = $region40
        $region39: #{tpu_custom_call.1} parent=27 // pred_region
          %vm206 = vcmask 0
          %207 = vst.msk [vmem:[#allocation2] sm:$0x1] %vm206, 0.0
        $region40: #{tpu_custom_call.1} parent=27 // pred_fallthru
          _
        // Predicated region
        $region41: #{tpu_custom_call.1} parent=27 // pred_check
          %p208 = pneg %p200
        $region42: #{tpu_custom_call.1} parent=27 // pred_check_branch
          %210 = sbr.rel (%p208) target = $region44
        $region43: #{tpu_custom_call.1} parent=27 // pred_region
          %v211 = vld [vmem:[#allocation3] sm:$0xff]
          %v212 = vld [vmem:[#allocation3 + $0x8] sm:$0xff]
          %v213 = vld [vmem:[#allocation2] sm:$0x1]
          %v214 = vmul.f32 %v211, %v211
          %v215 = vmul.f32 %v212, %v212
          %v216 = vadd.f32 %v214, %v215
          %217 = vadd.xlane.f32.xlu0 %v216
          %v218 = vpop.xlane.xlu0 %217
          %v219 = vrot.slane %v218, 4
          %v220 = vadd.f32 %v218, %v219
          %v221 = vrot.slane %v220, 2
          %v222 = vadd.f32 %v220, %v221
          %v223 = vrot.slane %v222, 1
          %v224 = vadd.f32 %v222, %v223
          %v225 = vadd.f32 %v213, %v224
          %vm226 = vcmask 0
          %227 = vst.msk [vmem:[#allocation2] sm:$0x1] %vm226, %v225
        $region44: #{tpu_custom_call.1} parent=27 // pred_fallthru
          _
        %p228 = scmp.eq.s32.totalorder %s24, 1
        // Predicated region
        $region45: #{tpu_custom_call.1} parent=27 // pred_check
          %p229 = pneg %p228
        $region46: #{tpu_custom_call.1} parent=27 // pred_check_branch
          %231 = sbr.rel (%p229) target = $region48
        $region47: #{tpu_custom_call.1} parent=27 // pred_region
          %v232 = vld [vmem:[#allocation3] sm:$0xff]
          %v233 = vld [vmem:[#allocation3 + $0x8] sm:$0xff]
          %v234 = vld [vmem:[#allocation2] sm:$0x1]
          %v235 = vmul.f32 %v234, 0.0009765625
          %v236 = vrsqrt.pop %v235
          %v238 = vlaneseq
          %v239 = vshrl.u32 %v238, 7
          %v240 = vsub.s32 0, %v239
          %v241 = vrot.slane %v236, %v240
          %242 = vset.pattern.permute.xlu0 0
          %243 = vperm.xlu0 %242, %v241
          %v244 = vpop.permute.xlu0 %243
          %v246 = vmul.f32 %v232, %v244
          %v247 = vmul.f32 %v233, %v244
          %v248 = vld [vmem:[%s177] sm:$0xff]
          %v249 = vld [vmem:[%s177 + $0x8] sm:$0xff]
          %v250 = vadd.f32 %v246, %v248
          %v251 = vadd.f32 %v247, %v249
          %252 = vst [vmem:[%s197] sm:$0xff] %v250
          %253 = vst [vmem:[%s197 + $0x8] sm:$0xff] %v251
        $region48: #{tpu_custom_call.1} parent=27 // pred_fallthru
          _
        %s254 = sand.u32 %s96, 1
        %s255 = scalar_lea.sflag [#allocation5], %s254
        %s256 = sand.u32 %s96, 1
        %s257 = smul.addr %s256, 16
        %s258 = scalar_lea.vmem [#allocation8], %s257
        // Predicated region
        $region49: #{tpu_custom_call.1} parent=27 // pred_check
          %p259 = pneg %p106
        $region50: #{tpu_custom_call.1} parent=27 // pred_check_branch
          %261 = sbr.rel (%p259) target = $region52
        $region51: #{tpu_custom_call.1} parent=27 // pred_region
          %s262 = smul.u32 %s25, %s24
          %s264 = ssub.s32 256, 256
          %265 = vsyncadd %s255, %s264
          %s266 = smul.addr %s262, 2
          %s267 = smul.addr %s266, 128
          %s268 = scalar_lea.hbm %s2, %s267
          %s270 = sshll.u32 %s258, 4
          %s271 = int_to_ptr.vmem [resolvable:$true] %s270
          %273 = dma.vmem_to_hbm [thread:$0]  %s271, 256, %s268, %s255
        $region52: #{tpu_custom_call.1} parent=27 // pred_fallthru
          _
      $region28: #{tpu_custom_call.1} parent=5 // pred_fallthru
        _
      %p274 = scmp.le.s32.totalorder 2, %s15
      // Predicated region
      $region53: #{tpu_custom_call.1} parent=5 // pred_check
        %p275 = pneg %p274
      $region54: #{tpu_custom_call.1} parent=5 // pred_check_branch
        %277 = sbr.rel (%p275) target = $region56
      $region55: #{tpu_custom_call.1} parent=5 // pred_region
        %s278 = ssub.s32 %s15, 2
        // Predicated region
        $region57: #{tpu_custom_call.1} parent=55 // pred_check
          %p279 = pneg %p112
        $region58: #{tpu_custom_call.1} parent=55 // pred_check_branch
          %281 = sbr.rel (%p279) target = $region60
        $region59: #{tpu_custom_call.1} parent=55 // pred_region
          %s282 = sand.u32 %s97, 1
          %s283 = scalar_lea.sflag [#allocation5], %s282
          %s284 = sand.u32 %s97, 1
          %s285 = smul.addr %s284, 16
          %s286 = scalar_lea.vmem [#allocation8], %s285
          %287 = dma.done %s283, 256
        $region60: #{tpu_custom_call.1} parent=55 // pred_fallthru
          _
      $region56: #{tpu_custom_call.1} parent=5 // pred_fallthru
        _
    $region6: #{tpu_custom_call.1} parent=1 // loop_footer
      %s19 = sadd.s32 1, %s15
    $region7: #{tpu_custom_call.1} parent=1 // loop_footer_branch
      %14 = sbr.rel target = $region3
    $region8: #{tpu_custom_call.1} parent=1 // loop_exit
      _
    %288 = vsyncpa [#allocation4], 1
    %s289 = scalar_lea.sflag [#allocation4], 1
    %290 = vsyncpa %s289, 1
    %291 = vsyncpa [#allocation7], 1
    %s292 = scalar_lea.sflag [#allocation7], 1
    %293 = vsyncpa %s292, 1
    %294 = vsyncpa [#allocation5], 1
    %s295 = scalar_lea.sflag [#allocation5], 1
    %296 = vsyncpa %s295, 1

</llo_original>
